<compile_context>
chip_gen: v7x
topology: tpu7x:2x2x1
jax: 0.10.0
libtpu: 0.0.40
codegen_flags: <defaults>
</compile_context>

<pallas_src>
import math

import jax
import jax.numpy as jnp
import numpy as np
from jax.experimental import pallas as pl
from jax.experimental.pallas import tpu as pltpu

IN_FEATURES = 28 * 28   # 784 (multiple of 8; full-dim block, no K padding in HBM)
HIDDEN = 128
OUT_FEATURES = 10
OUT_PADDED = 128        # lane-dense output width (unmasked vst)

# exponents = torch.arange(1, e + 1) -> [1., 2., 3.]  (used by the pure-JAX reference)
_EXPONENTS = np.arange(1.0, math.e + 1.0, dtype=np.float32)


def _round_up(n, m):
    return ((n + m - 1) // m) * m


def _select_tile(batch):
    """Batch-tile size: multiple of 16 (bf16 sublane packing), >= ~4 tiles so v7x's
    two TensorCores both get work, capped at 1024 (per-step overhead amortized),
    and grid = cdiv(B, TB) keeps ragged-tile waste small instead of padding B."""
    if batch <= 16:
        return 16
    tb = _round_up(pl.cdiv(batch, 4), 16)
    return min(tb, 1024)


def _testnet_kernel(x_ref, w1_ref, b1_ref, w2_ref, b2_ref, o_ref):
    # x arrives straight from HBM as f32 (no wrapper pad/cast passes); cast to
    # bf16 on the VPU right before the MXU feed.
    x = x_ref[...].astype(jnp.bfloat16)

    # fc1: (TB, 784) bf16 @ (784, 128) bf16 -> f32 accumulation (MXU pads K internally)
    h = jnp.dot(x, w1_ref[...], preferred_element_type=jnp.float32)
    h = h + b1_ref[...]

    # DoubleInverseSEM:  exp(-h) / sum_k exp(-k*h), k in {1,2,3}
    #                  = 1 / (1 + t + t^2)  with t = exp(-h)   (f32 on EUP/VPU)
    t = jnp.exp(-h)
    a = pl.reciprocal(1.0 + t + t * t, approx=True)

    # fc2: (TB, 128) bf16 @ (128, 128) bf16 -> f32; store lane-dense bf16.
    y = jnp.dot(a.astype(jnp.bfloat16), w2_ref[...],
                preferred_element_type=jnp.float32)
    o_ref[...] = (y + b2_ref[...]).astype(o_ref.dtype)


def prepare_params(w1, b1, w2, b2):
    """One-time padding / bf16 casting of the resident weights (hoisted out of the
    per-call forward).  Weights are stored transposed, (in, out)."""
    w1_p = w1.astype(jnp.bfloat16)                                   # (784, 128)
    b1_2d = b1.reshape(1, HIDDEN).astype(jnp.float32)                # (1, 128)
    w2_p = (jnp.zeros((HIDDEN, OUT_PADDED), jnp.float32)
            .at[:, :OUT_FEATURES].set(w2).astype(jnp.bfloat16))      # (128, 128)
    b2_2d = (jnp.zeros((1, OUT_PADDED), jnp.float32)
             .at[:, :OUT_FEATURES].set(b2.reshape(1, OUT_FEATURES))) # (1, 128)
    return w1_p, b1_2d, w2_p, b2_2d


def testnet_forward(x_nchw, w1_p, b1_2d, w2_p, b2_2d):
    """x_nchw: (B, 1, 28, 28) float32.  Padded/casted params from prepare_params.
    Returns (B, 10) float32."""
    B = x_nchw.shape[0]
    x = x_nchw.reshape(B, -1)            # x.view(x.size(0), -1); stays f32, unpadded
    assert x.shape[1] == IN_FEATURES

    TB = _select_tile(B)
    grid = (pl.cdiv(B, TB),)
    n_rows = grid[0] * TB                # rows actually streamed (incl. ragged tail)

    flops = 2 * n_rows * (IN_FEATURES * HIDDEN + HIDDEN * OUT_PADDED)
    bytes_accessed = (n_rows * IN_FEATURES * 4          # x read (f32)
                      + n_rows * OUT_PADDED * 2         # out write (bf16)
                      + IN_FEATURES * HIDDEN * 2 + HIDDEN * OUT_PADDED * 2
                      + HIDDEN * 4 + OUT_PADDED * 4)

    out = pl.pallas_call(
        _testnet_kernel,
        out_shape=jax.ShapeDtypeStruct((B, OUT_PADDED), jnp.bfloat16),
        grid_spec=pl.GridSpec(
            grid=grid,
            in_specs=[
                pl.BlockSpec((TB, IN_FEATURES), lambda i: (i, 0)),      # x batch tile
                pl.BlockSpec((IN_FEATURES, HIDDEN), lambda i: (0, 0)),  # w1 resident
                pl.BlockSpec((1, HIDDEN), lambda i: (0, 0)),            # b1 resident
                pl.BlockSpec((HIDDEN, OUT_PADDED), lambda i: (0, 0)),   # w2 resident
                pl.BlockSpec((1, OUT_PADDED), lambda i: (0, 0)),        # b2 resident
            ],
            out_specs=pl.BlockSpec((TB, OUT_PADDED), lambda i: (i, 0)),
        ),
        compiler_params=pltpu.CompilerParams(
            dimension_semantics=("parallel",),   # batch tiles are independent
        ),
        cost_estimate=pl.CostEstimate(
            flops=flops,
            transcendentals=n_rows * HIDDEN,
            bytes_accessed=bytes_accessed,
        ),
    )(x, w1_p, b1_2d, w2_p, b2_2d)

    # Valid rows/cols only; upcast the lane-dense bf16 slab back to f32.
    return out[:, :OUT_FEATURES].astype(jnp.float32)


def _init_params(key):
    """Deterministic init mimicking nn.Linear's uniform(-1/sqrt(in), 1/sqrt(in))."""
    k1, k2, k3, k4 = jax.random.split(key, 4)
    lim1 = 1.0 / math.sqrt(IN_FEATURES)
    lim2 = 1.0 / math.sqrt(HIDDEN)
    # stored as (in, out) == PyTorch weight.T
    w1 = jax.random.uniform(k1, (IN_FEATURES, HIDDEN), jnp.float32, -lim1, lim1)
    b1 = jax.random.uniform(k2, (HIDDEN,), jnp.float32, -lim1, lim1)
    w2 = jax.random.uniform(k3, (HIDDEN, OUT_FEATURES), jnp.float32, -lim2, lim2)
    b2 = jax.random.uniform(k4, (OUT_FEATURES,), jnp.float32, -lim2, lim2)
    return w1, b1, w2, b2


def _reference_forward(x_nchw, w1, b1, w2, b2):
    """Pure-JAX f32 reference implementing the literal module math."""
    x = x_nchw.reshape(x_nchw.shape[0], -1)
    h = x @ w1 + b1
    num = jnp.exp(-h)
    den = jnp.sum(jnp.exp(-h[..., None] * jnp.asarray(_EXPONENTS)), axis=-1)
    a = num / den
    return a @ w2 + b2


if __name__ == "__main__":
    key = jax.random.PRNGKey(0)
    kx, kp = jax.random.split(key)

    batch = 2
    x = jax.random.normal(kx, (batch, 1, 28, 28), dtype=jnp.float32)  # NCHW
    w1, b1, w2, b2 = _init_params(kp)

    # One-time weight prep (hoisted out of the forward).
    w1_p, b1_2d, w2_p, b2_2d = prepare_params(w1, b1, w2, b2)

    out = testnet_forward(x, w1_p, b1_2d, w2_p, b2_2d)
    out = jax.block_until_ready(out)

    ref = _reference_forward(x, w1, b1, w2, b2)
    # bf16 MXU operands + approx reciprocal + bf16 output store => compare against
    # the f32 reference with a correspondingly looser tolerance.
    np.testing.assert_allclose(np.asarray(out), np.asarray(ref), rtol=2e-2, atol=2e-2)

    print("KERNEL_OK")
</pallas_src>

<mosaic_0001>
module attributes {stable_mosaic.version = 11 : i64} {
  func.func @_testnet_kernel(%arg0: i32, %arg1: memref<16x784xf32, #tpu.memory_space<vmem>>, %arg2: memref<784x128xbf16, #tpu.memory_space<vmem>>, %arg3: memref<1x128xf32, #tpu.memory_space<vmem>>, %arg4: memref<128x128xbf16, #tpu.memory_space<vmem>>, %arg5: memref<1x128xf32, #tpu.memory_space<vmem>>, %arg6: memref<16x128xbf16, #tpu.memory_space<vmem>>) attributes {dimension_semantics = [#tpu.dimension_semantics<parallel>], iteration_bounds = array<i64: 1>, scalar_prefetch = 0 : i64, scratch_operands = 0 : i64, tpu.core_type = #tpu.core_type<tc>, window_params = [{transform_indices = @transform_0, window_bounds = array<i64: 16, 784>}, {pipeline_mode = #tpu.pipeline_mode<synchronous>, transform_indices = @transform_1, window_bounds = array<i64: 784, 128>}, {pipeline_mode = #tpu.pipeline_mode<synchronous>, transform_indices = @transform_2, window_bounds = array<i64: 1, 128>}, {pipeline_mode = #tpu.pipeline_mode<synchronous>, transform_indices = @transform_3, window_bounds = array<i64: 128, 128>}, {pipeline_mode = #tpu.pipeline_mode<synchronous>, transform_indices = @transform_4, window_bounds = array<i64: 1, 128>}, {transform_indices = @transform_5, window_bounds = array<i64: 16, 128>}]} {
    %c0 = arith.constant 0 : index
    %c0_0 = arith.constant 0 : index
    %0 = vector.load %arg1[%c0, %c0_0] : memref<16x784xf32, #tpu.memory_space<vmem>>, vector<16x784xf32>
    %1 = arith.truncf %0 : vector<16x784xf32> to vector<16x784xbf16>
    %c0_1 = arith.constant 0 : index
    %c0_2 = arith.constant 0 : index
    %2 = vector.load %arg2[%c0_1, %c0_2] : memref<784x128xbf16, #tpu.memory_space<vmem>>, vector<784x128xbf16>
    %cst = arith.constant dense<0.000000e+00> : vector<16x128xf32>
    %3 = tpu.matmul %1, %2, %cst {dimension_numbers = #tpu.dot_dimension_numbers<[1], [0], [0], [1], [0, 0, 1, 1], [], []>} : vector<16x784xbf16>, vector<784x128xbf16>, vector<16x128xf32> -> vector<16x128xf32>
    %c0_3 = arith.constant 0 : index
    %c0_4 = arith.constant 0 : index
    %4 = vector.load %arg3[%c0_3, %c0_4] : memref<1x128xf32, #tpu.memory_space<vmem>>, vector<1x128xf32>
    %5 = vector.broadcast %4 : vector<1x128xf32> to vector<16x128xf32>
    %6 = arith.addf %3, %5 : vector<16x128xf32>
    %cst_5 = arith.constant 0.000000e+00 : f32
    %7 = vector.broadcast %cst_5 : f32 to vector<16x128xf32>
    %8 = arith.subf %7, %6 : vector<16x128xf32>
    %9 = math.exp %8 : vector<16x128xf32>
    %cst_6 = arith.constant 1.000000e+00 : f32
    %10 = vector.broadcast %cst_6 : f32 to vector<16x128xf32>
    %11 = arith.addf %10, %9 : vector<16x128xf32>
    %12 = arith.mulf %9, %9 : vector<16x128xf32>
    %13 = arith.addf %11, %12 : vector<16x128xf32>
    %14 = tpu.reciprocal %13 {approx = true} : vector<16x128xf32> -> vector<16x128xf32>
    %15 = arith.truncf %14 : vector<16x128xf32> to vector<16x128xbf16>
    %c0_7 = arith.constant 0 : index
    %c0_8 = arith.constant 0 : index
    %16 = vector.load %arg4[%c0_7, %c0_8] : memref<128x128xbf16, #tpu.memory_space<vmem>>, vector<128x128xbf16>
    %cst_9 = arith.constant dense<0.000000e+00> : vector<16x128xf32>
    %17 = tpu.matmul %15, %16, %cst_9 {dimension_numbers = #tpu.dot_dimension_numbers<[1], [0], [0], [1], [0, 0, 1, 1], [], []>} : vector<16x128xbf16>, vector<128x128xbf16>, vector<16x128xf32> -> vector<16x128xf32>
    %c0_10 = arith.constant 0 : index
    %c0_11 = arith.constant 0 : index
    %18 = vector.load %arg5[%c0_10, %c0_11] : memref<1x128xf32, #tpu.memory_space<vmem>>, vector<1x128xf32>
    %19 = vector.broadcast %18 : vector<1x128xf32> to vector<16x128xf32>
    %20 = arith.addf %17, %19 : vector<16x128xf32>
    %21 = arith.truncf %20 : vector<16x128xf32> to vector<16x128xbf16>
    %c0_12 = arith.constant 0 : index
    %c0_13 = arith.constant 0 : index
    %22 = vector.load %arg6[%c0_12, %c0_13] : memref<16x128xbf16, #tpu.memory_space<vmem>>, vector<16x128xbf16>
    tpu.vector_store %arg6[%c0_12, %c0_13], %21 {strides = array<i32>} : memref<16x128xbf16, #tpu.memory_space<vmem>>, vector<16x128xbf16>,
    return
  }
  func.func @transform_0(%arg0: i32) -> (i32, i32) {
    %c0_i32 = arith.constant 0 : i32
    %c0_i32_0 = arith.constant 0 : i32
    return %arg0, %c0_i32 : i32, i32
  }
  func.func @transform_1(%arg0: i32) -> (i32, i32) {
    %c0_i32 = arith.constant 0 : i32
    %c0_i32_0 = arith.constant 0 : i32
    %c0_i32_1 = arith.constant 0 : i32
    return %c0_i32, %c0_i32_0 : i32, i32
  }
  func.func @transform_2(%arg0: i32) -> (i32, i32) {
    %c0_i32 = arith.constant 0 : i32
    %c0_i32_0 = arith.constant 0 : i32
    %c0_i32_1 = arith.constant 0 : i32
    return %c0_i32, %c0_i32_0 : i32, i32
  }
  func.func @transform_3(%arg0: i32) -> (i32, i32) {
    %c0_i32 = arith.constant 0 : i32
    %c0_i32_0 = arith.constant 0 : i32
    %c0_i32_1 = arith.constant 0 : i32
    return %c0_i32, %c0_i32_0 : i32, i32
  }
  func.func @transform_4(%arg0: i32) -> (i32, i32) {
    %c0_i32 = arith.constant 0 : i32
    %c0_i32_0 = arith.constant 0 : i32
    %c0_i32_1 = arith.constant 0 : i32
    return %c0_i32, %c0_i32_0 : i32, i32
  }
  func.func @transform_5(%arg0: i32) -> (i32, i32) {
    %c0_i32 = arith.constant 0 : i32
    %c0_i32_0 = arith.constant 0 : i32
    return %arg0, %c0_i32 : i32, i32
  }
}

</mosaic_0001>

<llo_original>
// kernel: tpu_custom_call.1
$region0: #{tpu_custom_call.1}
  #allocation0 [shape = 'u32[]', space=smem, size = 0x4, offset = 0x4, fixed_abs, tag = 'smem constant byte address 0x4 - core index']
  #allocation1 [shape = 'u32[144,128]{1,0:T(1,128)}', space=vmem, size = 0x12000, scoped, tag = 'internal scratch']
  %s0 = inlined_call_operand.hbm [shape: f32[2,784], index: 0, kind: input, shape index: {}]
  %s1 = inlined_call_operand.hbm [shape: bf16[784,128], index: 1, kind: input, shape index: {}]
  %s2 = inlined_call_operand.vmem [shape: f32[1,128], index: 2, kind: input, shape index: {}]
  %s3 = inlined_call_operand.hbm [shape: bf16[128,128], index: 3, kind: input, shape index: {}]
  %s4 = inlined_call_operand.vmem [shape: f32[1,128], index: 4, kind: input, shape index: {}]
  %s5 = inlined_call_operand.hbm [shape: bf16[2,128], index: 5, kind: output, shape index: {}]
  %s6 = sld [smem:[#allocation0]]
  $region42: #{tpu_custom_call.1} parent=0
    _
  %s8 = ssub.s32 1, %s6
  %s9 = scalar_select 0, %s8, %s6
  $region1: #{tpu_custom_call.1} parent=0
    #allocation2 [shape = 'u8[57344]{0}', space=vmem, size = 0xe000, scoped, tag = 'input window, operand 0, single buffered']
    #allocation3 [shape = 's32[1]{0}', space=sflag, size = 0x4, scoped, tag = 'scoped memory for tpu_custom_call.1']
    #allocation4 [shape = 's32[1]{0}', space=sflag, size = 0x4, scoped, tag = 'scoped memory for tpu_custom_call.1']
    #allocation5 [shape = 'u8[200704]{0}', space=vmem, size = 0x31000, scoped, tag = 'input window, operand 1, single buffered']
    #allocation6 [shape = 's32[1]{0}', space=sflag, size = 0x4, scoped, tag = 'scoped memory for tpu_custom_call.1']
    #allocation7 [shape = 'u8[32768]{0}', space=vmem, size = 0x8000, scoped, tag = 'input window, operand 3, single buffered']
    #allocation8 [shape = 'u8[4096]{0}', space=vmem, size = 0x1000, scoped, tag = 'output window, operand 0, single buffered']
    %10 = vsyncpa [#allocation3], 0
    %11 = vsyncpa [#allocation6], 0
    %12 = vsyncpa [#allocation4], 0
    // Predicated region
    $region2: #{tpu_custom_call.1} parent=1 // pred_check
      _
    $region3: #{tpu_custom_call.1} parent=1 // pred_check_branch
      %14 = sbr.rel (0) target = $region5
    $region4: #{tpu_custom_call.1} parent=1 // pred_region
      %s16 = ssub.s32 1792, 224
      %17 = vsyncadd [#allocation3], %s16
      %s18 = sshll.u32 [#allocation2], 4
      %s19 = int_to_ptr.vmem [resolvable:$true] %s18
      %24 = dma.hbm_to_vmem [thread:$0]  %s0, 224, %s19, [#allocation3], 224, 224, 14
    $region5: #{tpu_custom_call.1} parent=1 // pred_fallthru
      _
    // Predicated region
    $region6: #{tpu_custom_call.1} parent=1 // pred_check
      _
    $region7: #{tpu_custom_call.1} parent=1 // pred_check_branch
      %26 = sbr.rel (0) target = $region9
    $region8: #{tpu_custom_call.1} parent=1 // pred_region
      %s28 = ssub.s32 6272, 6272
      %29 = vsyncadd [#allocation6], %s28
      %s30 = sshll.u32 [#allocation5], 4
      %s31 = int_to_ptr.vmem [resolvable:$true] %s30
      %36 = dma.hbm_to_vmem [thread:$0]  %s1, 6272, %s31, [#allocation6], 64, 64, 4
    $region9: #{tpu_custom_call.1} parent=1 // pred_fallthru
      _
    // Predicated region
    $region10: #{tpu_custom_call.1} parent=1 // pred_check
      _
    $region11: #{tpu_custom_call.1} parent=1 // pred_check_branch
      %38 = sbr.rel (0) target = $region13
    $region12: #{tpu_custom_call.1} parent=1 // pred_region
      _
    $region13: #{tpu_custom_call.1} parent=1 // pred_fallthru
      _
    // Predicated region
    $region14: #{tpu_custom_call.1} parent=1 // pred_check
      _
    $region15: #{tpu_custom_call.1} parent=1 // pred_check_branch
      %40 = sbr.rel (0) target = $region17
    $region16: #{tpu_custom_call.1} parent=1 // pred_region
      %s42 = ssub.s32 1024, 1024
      %43 = vsyncadd [#allocation6], %s42
      %s44 = sshll.u32 [#allocation7], 4
      %s45 = int_to_ptr.vmem [resolvable:$true] %s44
      %50 = dma.hbm_to_vmem [thread:$0]  %s3, 1024, %s45, [#allocation6], 64, 64, 4
    $region17: #{tpu_custom_call.1} parent=1 // pred_fallthru
      _
    // Predicated region
    $region18: #{tpu_custom_call.1} parent=1 // pred_check
      _
    $region19: #{tpu_custom_call.1} parent=1 // pred_check_branch
      %52 = sbr.rel (0) target = $region21
    $region20: #{tpu_custom_call.1} parent=1 // pred_region
      _
    $region21: #{tpu_custom_call.1} parent=1 // pred_fallthru
      _
    // Predicated region
    $region22: #{tpu_custom_call.1} parent=1 // pred_check
      _
    $region23: #{tpu_custom_call.1} parent=1 // pred_check_branch
      %54 = sbr.rel (0) target = $region25
    $region24: #{tpu_custom_call.1} parent=1 // pred_region
      %55 = dma.done [#allocation3], 1792
    $region25: #{tpu_custom_call.1} parent=1 // pred_fallthru
      _
    // Predicated region
    $region26: #{tpu_custom_call.1} parent=1 // pred_check
      _
    $region27: #{tpu_custom_call.1} parent=1 // pred_check_branch
      %57 = sbr.rel (0) target = $region29
    $region28: #{tpu_custom_call.1} parent=1 // pred_region
      %58 = dma.done [#allocation6], 6272
    $region29: #{tpu_custom_call.1} parent=1 // pred_fallthru
      _
    // Predicated region
    $region30: #{tpu_custom_call.1} parent=1 // pred_check
      _
    $region31: #{tpu_custom_call.1} parent=1 // pred_check_branch
      %60 = sbr.rel (0) target = $region33
    $region32: #{tpu_custom_call.1} parent=1 // pred_region
      %61 = dma.done [#allocation6], 1024
    $region33: #{tpu_custom_call.1} parent=1 // pred_fallthru
      _
    %v63 = vld [vmem:[#allocation2] sm:$0xff]
    %v64 = vld [vmem:[#allocation2 + $0x8] sm:$0x3f]
    %v65 = vld [vmem:[#allocation2 + $0xe] sm:$0xff]
    %v66 = vld [vmem:[#allocation2 + $0x16] sm:$0x3f]
    %v67 = vld [vmem:[#allocation2 + $0x1c] sm:$0xff]
    %v68 = vld [vmem:[#allocation2 + $0x24] sm:$0x3f]
    %v69 = vld [vmem:[#allocation2 + $0x2a] sm:$0xff]
    %v70 = vld [vmem:[#allocation2 + $0x32] sm:$0x3f]
    %v71 = vld [vmem:[#allocation2 + $0x38] sm:$0xff]
    %v72 = vld [vmem:[#allocation2 + $0x40] sm:$0x3f]
    %v73 = vld [vmem:[#allocation2 + $0x46] sm:$0xff]
    %v74 = vld [vmem:[#allocation2 + $0x4e] sm:$0x3f]
    %v75 = vld [vmem:[#allocation2 + $0x54] sm:$0xff]
    %v76 = vld [vmem:[#allocation2 + $0x5c] sm:$0x3f]
    %v77 = vld [vmem:[#allocation2 + $0x62] sm:$0xff]
    %v78 = vld [vmem:[#allocation2 + $0x6a] sm:$0x3f]
    %v95 = vcombine.low %v63, %v65
    %v96 = vcombine.high %v63, %v65
    %v97 = vcombine.low %v67, %v69
    %v98 = vcombine.high %v67, %v69
    %v100 = vunpack.c.l.s4 1983009808
    %v101 = vunpack.c.0.s8 %v100
    %v102 = vlaneseq
    %v103 = vshrl.u32 %v102, 7
    %v104 = vsub.s32 %v101, %v103
    %v105 = vrot.slane %v95, %v104
    %v107 = vunpack.c.l.s4 1983009808
    %v108 = vunpack.c.0.s8 %v107
    %v109 = vlaneseq
    %v110 = vshrl.u32 %v109, 7
    %v111 = vsub.s32 %v108, %v110
    %v112 = vrot.slane %v96, %v111
    %v114 = vunpack.c.l.s4 1983009808
    %v115 = vunpack.c.0.s8 %v114
    %v116 = vlaneseq
    %v117 = vshrl.u32 %v116, 7
    %v118 = vsub.s32 %v115, %v117
    %v119 = vrot.slane %v97, %v118
    %v121 = vunpack.c.l.s4 1983009808
    %v122 = vunpack.c.0.s8 %v121
    %v123 = vlaneseq
    %v124 = vshrl.u32 %v123, 7
    %v125 = vsub.s32 %v122, %v124
    %v126 = vrot.slane %v98, %v125
    %v127 = vcombine.low %v105, %v119
    %v128 = vcombine.high %v105, %v119
    %v129 = vcombine.low %v112, %v126
    %v130 = vcombine.high %v112, %v126
    %v131 = vcombine.low %v64, %v66
    %v132 = vcombine.high %v64, %v66
    %v133 = vcombine.low %v68, %v70
    %v134 = vcombine.high %v68, %v70
    %v136 = vunpack.c.l.s4 1983009808
    %v137 = vunpack.c.0.s8 %v136
    %v138 = vlaneseq
    %v139 = vshrl.u32 %v138, 7
    %v140 = vsub.s32 %v137, %v139
    %v141 = vrot.slane %v131, %v140
    %v143 = vunpack.c.l.s4 1983009808
    %v144 = vunpack.c.0.s8 %v143
    %v145 = vlaneseq
    %v146 = vshrl.u32 %v145, 7
    %v147 = vsub.s32 %v144, %v146
    %v148 = vrot.slane %v132, %v147
    %v150 = vunpack.c.l.s4 1983009808
    %v151 = vunpack.c.0.s8 %v150
    %v152 = vlaneseq
    %v153 = vshrl.u32 %v152, 7
    %v154 = vsub.s32 %v151, %v153
    %v155 = vrot.slane %v133, %v154
    %v157 = vunpack.c.l.s4 1983009808
    %v158 = vunpack.c.0.s8 %v157
    %v159 = vlaneseq
    %v160 = vshrl.u32 %v159, 7
    %v161 = vsub.s32 %v158, %v160
    %v162 = vrot.slane %v134, %v161
    %v163 = vcombine.low %v141, %v155
    %v164 = vcombine.high %v141, %v155
    %v165 = vcombine.low %v148, %v162
    %v166 = vcombine.low %v71, %v73
    %v167 = vcombine.high %v71, %v73
    %v168 = vcombine.low %v75, %v77
    %v169 = vcombine.high %v75, %v77
    %v171 = vunpack.c.l.s4 1983009808
    %v172 = vunpack.c.0.s8 %v171
    %v173 = vlaneseq
    %v174 = vshrl.u32 %v173, 7
    %v175 = vsub.s32 %v172, %v174
    %v176 = vrot.slane %v166, %v175
    %v178 = vunpack.c.l.s4 1983009808
    %v179 = vunpack.c.0.s8 %v178
    %v180 = vlaneseq
    %v181 = vshrl.u32 %v180, 7
    %v182 = vsub.s32 %v179, %v181
    %v183 = vrot.slane %v167, %v182
    %v185 = vunpack.c.l.s4 1983009808
    %v186 = vunpack.c.0.s8 %v185
    %v187 = vlaneseq
    %v188 = vshrl.u32 %v187, 7
    %v189 = vsub.s32 %v186, %v188
    %v190 = vrot.slane %v168, %v189
    %v192 = vunpack.c.l.s4 1983009808
    %v193 = vunpack.c.0.s8 %v192
    %v194 = vlaneseq
    %v195 = vshrl.u32 %v194, 7
    %v196 = vsub.s32 %v193, %v195
    %v197 = vrot.slane %v169, %v196
    %v198 = vcombine.low %v176, %v190
    %v199 = vcombine.high %v176, %v190
    %v200 = vcombine.low %v183, %v197
    %v201 = vcombine.high %v183, %v197
    %v202 = vcombine.low %v72, %v74
    %v203 = vcombine.high %v72, %v74
    %v204 = vcombine.low %v76, %v78
    %v205 = vcombine.high %v76, %v78
    %v207 = vunpack.c.l.s4 1983009808
    %v208 = vunpack.c.0.s8 %v207
    %v209 = vlaneseq
    %v210 = vshrl.u32 %v209, 7
    %v211 = vsub.s32 %v208, %v210
    %v212 = vrot.slane %v202, %v211
    %v214 = vunpack.c.l.s4 1983009808
    %v215 = vunpack.c.0.s8 %v214
    %v216 = vlaneseq
    %v217 = vshrl.u32 %v216, 7
    %v218 = vsub.s32 %v215, %v217
    %v219 = vrot.slane %v203, %v218
    %v221 = vunpack.c.l.s4 1983009808
    %v222 = vunpack.c.0.s8 %v221
    %v223 = vlaneseq
    %v224 = vshrl.u32 %v223, 7
    %v225 = vsub.s32 %v222, %v224
    %v226 = vrot.slane %v204, %v225
    %v228 = vunpack.c.l.s4 1983009808
    %v229 = vunpack.c.0.s8 %v228
    %v230 = vlaneseq
    %v231 = vshrl.u32 %v230, 7
    %v232 = vsub.s32 %v229, %v231
    %v233 = vrot.slane %v205, %v232
    %v234 = vcombine.low %v212, %v226
    %v235 = vcombine.high %v212, %v226
    %v236 = vcombine.low %v219, %v233
    %v251 = vpack.c.bf16 %v198, %v127
    %v252 = vpack.c.bf16 %v199, %v128
    %v253 = vpack.c.bf16 %v200, %v129
    %v254 = vpack.c.bf16 %v201, %v130
    %v255 = vpack.c.bf16 %v234, %v163
    %v256 = vpack.c.bf16 %v235, %v164
    %v257 = vpack.c.bf16 %v236, %v165
    %v258 = vld [vmem:[#allocation5] sm:$0xf]
    %v259 = vld [vmem:[#allocation5 + $0x4] sm:$0xf]
    %v260 = vld [vmem:[#allocation5 + $0x8] sm:$0xf]
    %v261 = vld [vmem:[#allocation5 + $0xc] sm:$0xf]
    %v262 = vld [vmem:[#allocation5 + $0x10] sm:$0xf]
    %v263 = vld [vmem:[#allocation5 + $0x14] sm:$0xf]
    %v264 = vld [vmem:[#allocation5 + $0x18] sm:$0xf]
    %v265 = vld [vmem:[#allocation5 + $0x1c] sm:$0xf]
    %v266 = vld [vmem:[#allocation5 + $0x20] sm:$0xf]
    %v267 = vld [vmem:[#allocation5 + $0x24] sm:$0xf]
    %v268 = vld [vmem:[#allocation5 + $0x28] sm:$0xf]
    %v269 = vld [vmem:[#allocation5 + $0x2c] sm:$0xf]
    %v270 = vld [vmem:[#allocation5 + $0x30] sm:$0xf]
    %v271 = vld [vmem:[#allocation5 + $0x34] sm:$0xf]
    %v272 = vld [vmem:[#allocation5 + $0x38] sm:$0xf]
    %v273 = vld [vmem:[#allocation5 + $0x3c] sm:$0xf]
    %v274 = vld [vmem:[#allocation5 + $0x40] sm:$0xf]
    %v275 = vld [vmem:[#allocation5 + $0x44] sm:$0xf]
    %v276 = vld [vmem:[#allocation5 + $0x48] sm:$0xf]
    %v277 = vld [vmem:[#allocation5 + $0x4c] sm:$0xf]
    %v278 = vld [vmem:[#allocation5 + $0x50] sm:$0xf]
    %v279 = vld [vmem:[#allocation5 + $0x54] sm:$0xf]
    %v280 = vld [vmem:[#allocation5 + $0x58] sm:$0xf]
    %v281 = vld [vmem:[#allocation5 + $0x5c] sm:$0xf]
    %v282 = vld [vmem:[#allocation5 + $0x60] sm:$0xf]
    %v283 = vld [vmem:[#allocation5 + $0x64] sm:$0xf]
    %v284 = vld [vmem:[#allocation5 + $0x68] sm:$0xf]
    %v285 = vld [vmem:[#allocation5 + $0x6c] sm:$0xf]
    %v286 = vld [vmem:[#allocation5 + $0x70] sm:$0xf]
    %v287 = vld [vmem:[#allocation5 + $0x74] sm:$0xf]
    %v288 = vld [vmem:[#allocation5 + $0x78] sm:$0xf]
    %v289 = vld [vmem:[#allocation5 + $0x7c] sm:$0xf]
    %v290 = vld [vmem:[#allocation5 + $0x80] sm:$0xf]
    %v291 = vld [vmem:[#allocation5 + $0x84] sm:$0xf]
    %v292 = vld [vmem:[#allocation5 + $0x88] sm:$0xf]
    %v293 = vld [vmem:[#allocation5 + $0x8c] sm:$0xf]
    %v294 = vld [vmem:[#allocation5 + $0x90] sm:$0xf]
    %v295 = vld [vmem:[#allocation5 + $0x94] sm:$0xf]
    %v296 = vld [vmem:[#allocation5 + $0x98] sm:$0xf]
    %v297 = vld [vmem:[#allocation5 + $0x9c] sm:$0xf]
    %v298 = vld [vmem:[#allocation5 + $0xa0] sm:$0xf]
    %v299 = vld [vmem:[#allocation5 + $0xa4] sm:$0xf]
    %v300 = vld [vmem:[#allocation5 + $0xa8] sm:$0xf]
    %v301 = vld [vmem:[#allocation5 + $0xac] sm:$0xf]
    %v302 = vld [vmem:[#allocation5 + $0xb0] sm:$0xf]
    %v303 = vld [vmem:[#allocation5 + $0xb4] sm:$0xf]
    %v304 = vld [vmem:[#allocation5 + $0xb8] sm:$0xf]
    %v305 = vld [vmem:[#allocation5 + $0xbc] sm:$0xf]
    %v306 = vld [vmem:[#allocation5 + $0xc0] sm:$0xf]
    %v307 = vld [vmem:[#allocation5 + $0xc4] sm:$0xf]
    %v308 = vld [vmem:[#allocation5 + $0xc8] sm:$0xf]
    %v309 = vld [vmem:[#allocation5 + $0xcc] sm:$0xf]
    %v310 = vld [vmem:[#allocation5 + $0xd0] sm:$0xf]
    %v311 = vld [vmem:[#allocation5 + $0xd4] sm:$0xf]
    %v312 = vld [vmem:[#allocation5 + $0xd8] sm:$0xf]
    %v313 = vld [vmem:[#allocation5 + $0xdc] sm:$0xf]
    %v314 = vld [vmem:[#allocation5 + $0xe0] sm:$0xf]
    %v315 = vld [vmem:[#allocation5 + $0xe4] sm:$0xf]
    %v316 = vld [vmem:[#allocation5 + $0xe8] sm:$0xf]
    %v317 = vld [vmem:[#allocation5 + $0xec] sm:$0xf]
    %v318 = vld [vmem:[#allocation5 + $0xf0] sm:$0xf]
    %v319 = vld [vmem:[#allocation5 + $0xf4] sm:$0xf]
    %v320 = vld [vmem:[#allocation5 + $0xf8] sm:$0xf]
    %v321 = vld [vmem:[#allocation5 + $0xfc] sm:$0xf]
    %v322 = vld [vmem:[#allocation5 + $0x100] sm:$0xf]
    %v323 = vld [vmem:[#allocation5 + $0x104] sm:$0xf]
    %v324 = vld [vmem:[#allocation5 + $0x108] sm:$0xf]
    %v325 = vld [vmem:[#allocation5 + $0x10c] sm:$0xf]
    %v326 = vld [vmem:[#allocation5 + $0x110] sm:$0xf]
    %v327 = vld [vmem:[#allocation5 + $0x114] sm:$0xf]
    %v328 = vld [vmem:[#allocation5 + $0x118] sm:$0xf]
    %v329 = vld [vmem:[#allocation5 + $0x11c] sm:$0xf]
    %v330 = vld [vmem:[#allocation5 + $0x120] sm:$0xf]
    %v331 = vld [vmem:[#allocation5 + $0x124] sm:$0xf]
    %v332 = vld [vmem:[#allocation5 + $0x128] sm:$0xf]
    %v333 = vld [vmem:[#allocation5 + $0x12c] sm:$0xf]
    %v334 = vld [vmem:[#allocation5 + $0x130] sm:$0xf]
    %v335 = vld [vmem:[#allocation5 + $0x134] sm:$0xf]
    %v336 = vld [vmem:[#allocation5 + $0x138] sm:$0xf]
    %v337 = vld [vmem:[#allocation5 + $0x13c] sm:$0xf]
    %v338 = vld [vmem:[#allocation5 + $0x140] sm:$0xf]
    %v339 = vld [vmem:[#allocation5 + $0x144] sm:$0xf]
    %v340 = vld [vmem:[#allocation5 + $0x148] sm:$0xf]
    %v341 = vld [vmem:[#allocation5 + $0x14c] sm:$0xf]
    %v342 = vld [vmem:[#allocation5 + $0x150] sm:$0xf]
    %v343 = vld [vmem:[#allocation5 + $0x154] sm:$0xf]
    %v344 = vld [vmem:[#allocation5 + $0x158] sm:$0xf]
    %v345 = vld [vmem:[#allocation5 + $0x15c] sm:$0xf]
    %v346 = vld [vmem:[#allocation5 + $0x160] sm:$0xf]
    %v347 = vld [vmem:[#allocation5 + $0x164] sm:$0xf]
    %v348 = vld [vmem:[#allocation5 + $0x168] sm:$0xf]
    %v349 = vld [vmem:[#allocation5 + $0x16c] sm:$0xf]
    %v350 = vld [vmem:[#allocation5 + $0x170] sm:$0xf]
    %v351 = vld [vmem:[#allocation5 + $0x174] sm:$0xf]
    %v352 = vld [vmem:[#allocation5 + $0x178] sm:$0xf]
    %v353 = vld [vmem:[#allocation5 + $0x17c] sm:$0xf]
    %v354 = vld [vmem:[#allocation5 + $0x180] sm:$0xf]
    %v355 = vld [vmem:[#allocation5 + $0x184] sm:$0xf]
    %v356 = vld [vmem:[%s2] sm:$0x1]
    %v358 = vlaneseq
    %v359 = vshrl.u32 %v358, 7
    %v360 = vsub.s32 0, %v359
    %v361 = vrot.slane %v356, %v360
    %v461 = vunpack.c.l.b16 %v258
    %v462 = vunpack.c.l.b16 %v259
    %v463 = vunpack.c.l.b16 %v260
    %v464 = vunpack.c.l.b16 %v261
    %v465 = vunpack.c.l.b16 %v262
    %v466 = vunpack.c.l.b16 %v263
    %v467 = vunpack.c.l.b16 %v264
    %v468 = vunpack.c.l.b16 %v265
    %v469 = vunpack.c.l.b16 %v266
    %v470 = vunpack.c.l.b16 %v267
    %v471 = vunpack.c.l.b16 %v268
    %v472 = vunpack.c.l.b16 %v269
    %v473 = vunpack.c.l.b16 %v270
    %v474 = vunpack.c.l.b16 %v271
    %v475 = vunpack.c.l.b16 %v272
    %v476 = vunpack.c.l.b16 %v273
    %v477 = vunpack.c.l.b16 %v274
    %v478 = vunpack.c.l.b16 %v275
    %v479 = vunpack.c.l.b16 %v276
    %v480 = vunpack.c.l.b16 %v277
    %v481 = vunpack.c.l.b16 %v278
    %v482 = vunpack.c.l.b16 %v279
    %v483 = vunpack.c.l.b16 %v280
    %v484 = vunpack.c.l.b16 %v281
    %v485 = vunpack.c.l.b16 %v282
    %v486 = vunpack.c.l.b16 %v283
    %v487 = vunpack.c.l.b16 %v284
    %v488 = vunpack.c.l.b16 %v285
    %v489 = vunpack.c.l.b16 %v286
    %v490 = vunpack.c.l.b16 %v287
    %v491 = vunpack.c.l.b16 %v288
    %v492 = vunpack.c.l.b16 %v289
    %v493 = vunpack.c.l.b16 %v290
    %v494 = vunpack.c.l.b16 %v291
    %v495 = vunpack.c.l.b16 %v292
    %v496 = vunpack.c.l.b16 %v293
    %v497 = vunpack.c.l.b16 %v294
    %v498 = vunpack.c.l.b16 %v295
    %v499 = vunpack.c.l.b16 %v296
    %v500 = vunpack.c.l.b16 %v297
    %v501 = vunpack.c.l.b16 %v298
    %v502 = vunpack.c.l.b16 %v299
    %v503 = vunpack.c.l.b16 %v300
    %v504 = vunpack.c.l.b16 %v301
    %v505 = vunpack.c.l.b16 %v302
    %v506 = vunpack.c.l.b16 %v303
    %v507 = vunpack.c.l.b16 %v304
    %v508 = vunpack.c.l.b16 %v305
    %v509 = vunpack.c.l.b16 %v306
    %v510 = vunpack.c.l.b16 %v307
    %v511 = vunpack.c.l.b16 %v308
    %v512 = vunpack.c.l.b16 %v309
    %v513 = vunpack.c.l.b16 %v310
    %v514 = vunpack.c.l.b16 %v311
    %v515 = vunpack.c.l.b16 %v312
    %v516 = vunpack.c.l.b16 %v313
    %v517 = vunpack.c.l.b16 %v314
    %v518 = vunpack.c.l.b16 %v315
    %v519 = vunpack.c.l.b16 %v316
    %v520 = vunpack.c.l.b16 %v317
    %v521 = vunpack.c.l.b16 %v318
    %v522 = vunpack.c.l.b16 %v319
    %v523 = vunpack.c.l.b16 %v320
    %v524 = vunpack.c.l.b16 %v321
    %v525 = vunpack.c.l.b16 %v322
    %v526 = vunpack.c.l.b16 %v323
    %v527 = vunpack.c.l.b16 %v324
    %v528 = vunpack.c.l.b16 %v325
    %v529 = vunpack.c.l.b16 %v326
    %v530 = vunpack.c.l.b16 %v327
    %v531 = vunpack.c.l.b16 %v328
    %v532 = vunpack.c.l.b16 %v329
    %v533 = vunpack.c.l.b16 %v330
    %v534 = vunpack.c.l.b16 %v331
    %v535 = vunpack.c.l.b16 %v332
    %v536 = vunpack.c.l.b16 %v333
    %v537 = vunpack.c.l.b16 %v334
    %v538 = vunpack.c.l.b16 %v335
    %v539 = vunpack.c.l.b16 %v336
    %v540 = vunpack.c.l.b16 %v337
    %v541 = vunpack.c.l.b16 %v338
    %v542 = vunpack.c.l.b16 %v339
    %v543 = vunpack.c.l.b16 %v340
    %v544 = vunpack.c.l.b16 %v341
    %v545 = vunpack.c.l.b16 %v342
    %v546 = vunpack.c.l.b16 %v343
    %v547 = vunpack.c.l.b16 %v344
    %v548 = vunpack.c.l.b16 %v345
    %v549 = vunpack.c.l.b16 %v346
    %v550 = vunpack.c.l.b16 %v347
    %v551 = vunpack.c.l.b16 %v348
    %v552 = vunpack.c.l.b16 %v349
    %v553 = vunpack.c.l.b16 %v350
    %v554 = vunpack.c.l.b16 %v351
    %v555 = vunpack.c.l.b16 %v352
    %v556 = vunpack.c.l.b16 %v353
    %v557 = vunpack.c.l.b16 %v354
    %v558 = vunpack.c.l.b16 %v355
    %v559 = vpack.c.b16 %v462, %v461
    %v560 = vpack.c.b16 %v464, %v463
    %v561 = vpack.c.b16 %v466, %v465
    %v562 = vpack.c.b16 %v468, %v467
    %v563 = vpack.c.b16 %v470, %v469
    %v564 = vpack.c.b16 %v472, %v471
    %v565 = vpack.c.b16 %v474, %v473
    %v566 = vpack.c.b16 %v476, %v475
    %v567 = vpack.c.b16 %v478, %v477
    %v568 = vpack.c.b16 %v480, %v479
    %v569 = vpack.c.b16 %v482, %v481
    %v570 = vpack.c.b16 %v484, %v483
    %v571 = vpack.c.b16 %v486, %v485
    %v572 = vpack.c.b16 %v488, %v487
    %v573 = vpack.c.b16 %v490, %v489
    %v574 = vpack.c.b16 %v492, %v491
    %v575 = vpack.c.b16 %v494, %v493
    %v576 = vpack.c.b16 %v496, %v495
    %v577 = vpack.c.b16 %v498, %v497
    %v578 = vpack.c.b16 %v500, %v499
    %v579 = vpack.c.b16 %v502, %v501
    %v580 = vpack.c.b16 %v504, %v503
    %v581 = vpack.c.b16 %v506, %v505
    %v582 = vpack.c.b16 %v508, %v507
    %v583 = vpack.c.b16 %v510, %v509
    %v584 = vpack.c.b16 %v512, %v511
    %v585 = vpack.c.b16 %v514, %v513
    %v586 = vpack.c.b16 %v516, %v515
    %v587 = vpack.c.b16 %v518, %v517
    %v588 = vpack.c.b16 %v520, %v519
    %v589 = vpack.c.b16 %v522, %v521
    %v590 = vpack.c.b16 %v524, %v523
    %v591 = vpack.c.b16 %v526, %v525
    %v592 = vpack.c.b16 %v528, %v527
    %v593 = vpack.c.b16 %v530, %v529
    %v594 = vpack.c.b16 %v532, %v531
    %v595 = vpack.c.b16 %v534, %v533
    %v596 = vpack.c.b16 %v536, %v535
    %v597 = vpack.c.b16 %v538, %v537
    %v598 = vpack.c.b16 %v540, %v539
    %v599 = vpack.c.b16 %v542, %v541
    %v600 = vpack.c.b16 %v544, %v543
    %v601 = vpack.c.b16 %v546, %v545
    %v602 = vpack.c.b16 %v548, %v547
    %v603 = vpack.c.b16 %v550, %v549
    %v604 = vpack.c.b16 %v552, %v551
    %v605 = vpack.c.b16 %v554, %v553
    %v606 = vpack.c.b16 %v556, %v555
    %v607 = vpack.c.b16 %v558, %v557
    %vm657 = vcmask 130048
    %v659 = vsel %vm657, %v257, 0
    %661 = vmatprep.subr.bf16.mxu0 0
    %662 = vmatpush1.bf16.msra.mxu0 %v559
    %663 = vmatprep.subr.bf16.mxu0 0
    %664 = vmatpush1.bf16.msra.mxu0 %v560
    %665 = vmatprep.subr.bf16.mxu0 0
    %666 = vmatpush1.bf16.msra.mxu0 %v561
    %667 = vmatprep.subr.bf16.mxu0 0
    %668 = vmatpush1.bf16.msra.mxu0 %v562
    %669 = vmatprep.subr.bf16.mxu0 0
    %670 = vmatpush1.bf16.msra.mxu0 %v563
    %671 = vmatprep.subr.bf16.mxu0 0
    %672 = vmatpush1.bf16.msra.mxu0 %v564
    %673 = vmatprep.subr.bf16.mxu0 0
    %674 = vmatpush1.bf16.msra.mxu0 %v565
    %675 = vmatprep.subr.bf16.mxu0 0
    %676 = vmatpush1.bf16.msra.mxu0 %v566
    %677 = vmatprep.subr.bf16.mxu0 0
    %678 = vmatpush1.bf16.msra.mxu0 %v567
    %679 = vmatprep.subr.bf16.mxu0 0
    %680 = vmatpush1.bf16.msra.mxu0 %v568
    %681 = vmatprep.subr.bf16.mxu0 0
    %682 = vmatpush1.bf16.msra.mxu0 %v569
    %683 = vmatprep.subr.bf16.mxu0 0
    %684 = vmatpush1.bf16.msra.mxu0 %v570
    %685 = vmatprep.subr.bf16.mxu0 0
    %686 = vmatpush1.bf16.msra.mxu0 %v571
    %687 = vmatprep.subr.bf16.mxu0 0
    %688 = vmatpush1.bf16.msra.mxu0 %v572
    %689 = vmatprep.subr.bf16.mxu0 0
    %690 = vmatpush1.bf16.msra.mxu0 %v573
    %691 = vmatprep.subr.bf16.mxu0 0
    %692 = vmatpush1.bf16.msra.mxu0 %v574
    %693 = vmatprep.mubr.bf16.mxu0 %v252
    %694 = vmatmul.mubr.bf16.gmra.mrb[0].mxu0 %v251
    %v695 = vpop.f32.mrb[0].mxu0
    %v696 = vadd.f32 %v361, %v695
    %v697 = vpop.f32.mrb[0].mxu0
    %v698 = vpop.f32.mrb[0].mxu0
    %v699 = vadd.f32 %v361, %v698
    %v700 = vpop.f32.mrb[0].mxu0
    %701 = vdwg.mxu0
    %702 = vmatprep.subr.bf16.mxu0 0
    %703 = vmatpush1.bf16.msra.mxu0 %v575
    %704 = vmatprep.subr.bf16.mxu0 0
    %705 = vmatpush1.bf16.msra.mxu0 %v576
    %706 = vmatprep.subr.bf16.mxu0 0
    %707 = vmatpush1.bf16.msra.mxu0 %v577
    %708 = vmatprep.subr.bf16.mxu0 0
    %709 = vmatpush1.bf16.msra.mxu0 %v578
    %710 = vmatprep.subr.bf16.mxu0 0
    %711 = vmatpush1.bf16.msra.mxu0 %v579
    %712 = vmatprep.subr.bf16.mxu0 0
    %713 = vmatpush1.bf16.msra.mxu0 %v580
    %714 = vmatprep.subr.bf16.mxu0 0
    %715 = vmatpush1.bf16.msra.mxu0 %v581
    %716 = vmatprep.subr.bf16.mxu0 0
    %717 = vmatpush1.bf16.msra.mxu0 %v582
    %718 = vmatprep.subr.bf16.mxu0 0
    %719 = vmatpush1.bf16.msra.mxu0 %v583
    %720 = vmatprep.subr.bf16.mxu0 0
    %721 = vmatpush1.bf16.msra.mxu0 %v584
    %722 = vmatprep.subr.bf16.mxu0 0
    %723 = vmatpush1.bf16.msra.mxu0 %v585
    %724 = vmatprep.subr.bf16.mxu0 0
    %725 = vmatpush1.bf16.msra.mxu0 %v586
    %726 = vmatprep.subr.bf16.mxu0 0
    %727 = vmatpush1.bf16.msra.mxu0 %v587
    %728 = vmatprep.subr.bf16.mxu0 0
    %729 = vmatpush1.bf16.msra.mxu0 %v588
    %730 = vmatprep.subr.bf16.mxu0 0
    %731 = vmatpush1.bf16.msra.mxu0 %v589
    %732 = vmatprep.subr.bf16.mxu0 0
    %733 = vmatpush1.bf16.msra.mxu0 %v590
    %734 = vmatprep.mubr.bf16.mxu0 %v254
    %735 = vmatmul.mubr.bf16.gmra.mrb[0].mxu0 %v253
    %v736 = vpop.f32.mrb[0].mxu0
    %v737 = vadd.f32 %v696, %v736
    %v738 = vpop.f32.mrb[0].mxu0
    %v739 = vpop.f32.mrb[0].mxu0
    %v740 = vadd.f32 %v699, %v739
    %v741 = vpop.f32.mrb[0].mxu0
    %742 = vdwg.mxu0
    %743 = vmatprep.subr.bf16.mxu0 0
    %744 = vmatpush1.bf16.msra.mxu0 %v591
    %745 = vmatprep.subr.bf16.mxu0 0
    %746 = vmatpush1.bf16.msra.mxu0 %v592
    %747 = vmatprep.subr.bf16.mxu0 0
    %748 = vmatpush1.bf16.msra.mxu0 %v593
    %749 = vmatprep.subr.bf16.mxu0 0
    %750 = vmatpush1.bf16.msra.mxu0 %v594
    %751 = vmatprep.subr.bf16.mxu0 0
    %752 = vmatpush1.bf16.msra.mxu0 %v595
    %753 = vmatprep.subr.bf16.mxu0 0
    %754 = vmatpush1.bf16.msra.mxu0 %v596
    %755 = vmatprep.subr.bf16.mxu0 0
    %756 = vmatpush1.bf16.msra.mxu0 %v597
    %757 = vmatprep.subr.bf16.mxu0 0
    %758 = vmatpush1.bf16.msra.mxu0 %v598
    %759 = vmatprep.subr.bf16.mxu0 0
    %760 = vmatpush1.bf16.msra.mxu0 %v599
    %761 = vmatprep.subr.bf16.mxu0 0
    %762 = vmatpush1.bf16.msra.mxu0 %v600
    %763 = vmatprep.subr.bf16.mxu0 0
    %764 = vmatpush1.bf16.msra.mxu0 %v601
    %765 = vmatprep.subr.bf16.mxu0 0
    %766 = vmatpush1.bf16.msra.mxu0 %v602
    %767 = vmatprep.subr.bf16.mxu0 0
    %768 = vmatpush1.bf16.msra.mxu0 %v603
    %769 = vmatprep.subr.bf16.mxu0 0
    %770 = vmatpush1.bf16.msra.mxu0 %v604
    %771 = vmatprep.subr.bf16.mxu0 0
    %772 = vmatpush1.bf16.msra.mxu0 %v605
    %773 = vmatprep.subr.bf16.mxu0 0
    %774 = vmatpush1.bf16.msra.mxu0 %v606
    %775 = vmatprep.mubr.bf16.mxu0 %v256
    %776 = vmatmul.mubr.bf16.gmra.mrb[0].mxu0 %v255
    %v777 = vpop.f32.mrb[0].mxu0
    %v778 = vadd.f32 %v737, %v777
    %v779 = vpop.f32.mrb[0].mxu0
    %v780 = vpop.f32.mrb[0].mxu0
    %v781 = vadd.f32 %v740, %v780
    %v782 = vpop.f32.mrb[0].mxu0
    %783 = vdwg.mxu0
    %784 = vmatprep.subr.bf16.mxu0 0
    %785 = vmatpush1.bf16.msra.mxu0 %v607
    %786 = vmatprep.subr.bf16.mxu0 0
    %787 = vmatpush1.bf16.msra.mxu0 0
    %788 = vmatprep.subr.bf16.mxu0 0
    %789 = vmatpush1.bf16.msra.mxu0 0
    %790 = vmatprep.subr.bf16.mxu0 0
    %791 = vmatpush1.bf16.msra.mxu0 0
    %792 = vmatprep.subr.bf16.mxu0 0
    %793 = vmatpush1.bf16.msra.mxu0 0
    %794 = vmatprep.subr.bf16.mxu0 0
    %795 = vmatpush1.bf16.msra.mxu0 0
    %796 = vmatprep.subr.bf16.mxu0 0
    %797 = vmatpush1.bf16.msra.mxu0 0
    %798 = vmatprep.subr.bf16.mxu0 0
    %799 = vmatpush1.bf16.msra.mxu0 0
    %800 = vmatprep.subr.bf16.mxu0 0
    %801 = vmatpush1.bf16.msra.mxu0 0
    %802 = vmatprep.subr.bf16.mxu0 0
    %803 = vmatpush1.bf16.msra.mxu0 0
    %804 = vmatprep.subr.bf16.mxu0 0
    %805 = vmatpush1.bf16.msra.mxu0 0
    %806 = vmatprep.subr.bf16.mxu0 0
    %807 = vmatpush1.bf16.msra.mxu0 0
    %808 = vmatprep.subr.bf16.mxu0 0
    %809 = vmatpush1.bf16.msra.mxu0 0
    %810 = vmatprep.subr.bf16.mxu0 0
    %811 = vmatpush1.bf16.msra.mxu0 0
    %812 = vmatprep.subr.bf16.mxu0 0
    %813 = vmatpush1.bf16.msra.mxu0 0
    %814 = vmatprep.subr.bf16.mxu0 0
    %815 = vmatpush1.bf16.msra.mxu0 0
    %816 = vmatprep.mubr.bf16.mxu0 0
    %817 = vmatmul.mubr.bf16.gmra.mrb[0].mxu0 %v659
    %v818 = vpop.f32.mrb[0].mxu0
    %v819 = vadd.f32 %v778, %v818
    %v820 = vpop.f32.mrb[0].mxu0
    %v821 = vpop.f32.mrb[0].mxu0
    %v822 = vadd.f32 %v781, %v821
    %v823 = vpop.f32.mrb[0].mxu0
    %824 = vdwg.mxu0
    %v825 = vsub.f32 0.0, %v819
    %v826 = vsub.f32 0.0, %v822
    %v827 = vmul.f32 %v825, 1.442695
    %v828 = vpow.pop %v827
    %v829 = vmul.f32 %v826, 1.442695
    %v830 = vpow.pop %v829
    %v831 = vadd.f32 %v828, 1.0
    %v832 = vadd.f32 %v830, 1.0
    %v833 = vmul.f32 %v828, %v828
    %v834 = vmul.f32 %v830, %v830
    %v835 = vadd.f32 %v831, %v833
    %v836 = vadd.f32 %v832, %v834
    %v837 = vrcp.pop %v835
    %v838 = vrcp.pop %v836
    %v839 = vpack.c.bf16 %v838, %v837
    %v840 = vld [vmem:[#allocation7] sm:$0xf]
    %v841 = vld [vmem:[#allocation7 + $0x4] sm:$0xf]
    %v842 = vld [vmem:[#allocation7 + $0x8] sm:$0xf]
    %v843 = vld [vmem:[#allocation7 + $0xc] sm:$0xf]
    %v844 = vld [vmem:[#allocation7 + $0x10] sm:$0xf]
    %v845 = vld [vmem:[#allocation7 + $0x14] sm:$0xf]
    %v846 = vld [vmem:[#allocation7 + $0x18] sm:$0xf]
    %v847 = vld [vmem:[#allocation7 + $0x1c] sm:$0xf]
    %v848 = vld [vmem:[#allocation7 + $0x20] sm:$0xf]
    %v849 = vld [vmem:[#allocation7 + $0x24] sm:$0xf]
    %v850 = vld [vmem:[#allocation7 + $0x28] sm:$0xf]
    %v851 = vld [vmem:[#allocation7 + $0x2c] sm:$0xf]
    %v852 = vld [vmem:[#allocation7 + $0x30] sm:$0xf]
    %v853 = vld [vmem:[#allocation7 + $0x34] sm:$0xf]
    %v854 = vld [vmem:[#allocation7 + $0x38] sm:$0xf]
    %v855 = vld [vmem:[#allocation7 + $0x3c] sm:$0xf]
    %v856 = vld [vmem:[%s4] sm:$0x1]
    %v858 = vlaneseq
    %v859 = vshrl.u32 %v858, 7
    %v860 = vsub.s32 0, %v859
    %v861 = vrot.slane %v856, %v860
    %v879 = vunpack.c.l.b16 %v840
    %v880 = vunpack.c.l.b16 %v841
    %v881 = vunpack.c.l.b16 %v842
    %v882 = vunpack.c.l.b16 %v843
    %v883 = vunpack.c.l.b16 %v844
    %v884 = vunpack.c.l.b16 %v845
    %v885 = vunpack.c.l.b16 %v846
    %v886 = vunpack.c.l.b16 %v847
    %v887 = vunpack.c.l.b16 %v848
    %v888 = vunpack.c.l.b16 %v849
    %v889 = vunpack.c.l.b16 %v850
    %v890 = vunpack.c.l.b16 %v851
    %v891 = vunpack.c.l.b16 %v852
    %v892 = vunpack.c.l.b16 %v853
    %v893 = vunpack.c.l.b16 %v854
    %v894 = vunpack.c.l.b16 %v855
    %v895 = vpack.c.b16 %v880, %v879
    %v896 = vpack.c.b16 %v882, %v881
    %v897 = vpack.c.b16 %v884, %v883
    %v898 = vpack.c.b16 %v886, %v885
    %v899 = vpack.c.b16 %v888, %v887
    %v900 = vpack.c.b16 %v890, %v889
    %v901 = vpack.c.b16 %v892, %v891
    %v902 = vpack.c.b16 %v894, %v893
    %911 = vmatprep.subr.bf16.mxu0 0
    %912 = vmatpush1.bf16.msra.mxu0 %v895
    %913 = vmatprep.subr.bf16.mxu0 0
    %914 = vmatpush1.bf16.msra.mxu0 %v896
    %915 = vmatprep.subr.bf16.mxu0 0
    %916 = vmatpush1.bf16.msra.mxu0 %v897
    %917 = vmatprep.subr.bf16.mxu0 0
    %918 = vmatpush1.bf16.msra.mxu0 %v898
    %919 = vmatprep.subr.bf16.mxu0 0
    %920 = vmatpush1.bf16.msra.mxu0 %v899
    %921 = vmatprep.subr.bf16.mxu0 0
    %922 = vmatpush1.bf16.msra.mxu0 %v900
    %923 = vmatprep.subr.bf16.mxu0 0
    %924 = vmatpush1.bf16.msra.mxu0 %v901
    %925 = vmatprep.subr.bf16.mxu0 0
    %926 = vmatpush1.bf16.msra.mxu0 %v902
    %927 = vmatprep.subr.bf16.mxu0 0
    %928 = vmatpush1.bf16.msra.mxu0 0
    %929 = vmatprep.subr.bf16.mxu0 0
    %930 = vmatpush1.bf16.msra.mxu0 0
    %931 = vmatprep.subr.bf16.mxu0 0
    %932 = vmatpush1.bf16.msra.mxu0 0
    %933 = vmatprep.subr.bf16.mxu0 0
    %934 = vmatpush1.bf16.msra.mxu0 0
    %935 = vmatprep.subr.bf16.mxu0 0
    %936 = vmatpush1.bf16.msra.mxu0 0
    %937 = vmatprep.subr.bf16.mxu0 0
    %938 = vmatpush1.bf16.msra.mxu0 0
    %939 = vmatprep.subr.bf16.mxu0 0
    %940 = vmatpush1.bf16.msra.mxu0 0
    %941 = vmatprep.subr.bf16.mxu0 0
    %942 = vmatpush1.bf16.msra.mxu0 0
    %943 = vmatprep.mubr.bf16.mxu0 0
    %944 = vmatmul.mubr.bf16.gmra.mrb[0].mxu0 %v839
    %v945 = vpop.f32.mrb[0].mxu0
    %v946 = vadd.f32 %v861, %v945
    %v947 = vpop.f32.mrb[0].mxu0
    %v948 = vpop.f32.mrb[0].mxu0
    %v949 = vadd.f32 %v861, %v948
    %v950 = vpop.f32.mrb[0].mxu0
    %951 = vdwg.mxu0
    %v952 = vpack.c.bf16 %v949, %v946
    %v954 = vcombine.high %v952, %v952
    %v956 = vunpack.c.l.s4 1966171168
    %v957 = vunpack.c.0.s8 %v956
    %v958 = vlaneseq
    %v959 = vshrl.u32 %v958, 7
    %v960 = vsub.s32 %v957, %v959
    %v961 = vrot.slane %v952, %v960
    %v963 = vunpack.c.l.s4 1966171168
    %v964 = vunpack.c.0.s8 %v963
    %v965 = vlaneseq
    %v966 = vshrl.u32 %v965, 7
    %v967 = vsub.s32 %v964, %v966
    %v968 = vrot.slane %v954, %v967
    %v969 = vcombine.high %v961, %v961
    %v970 = vcombine.high %v968, %v968
    %v972 = vunpack.c.l.s4 1966171168
    %v973 = vunpack.c.0.s8 %v972
    %v974 = vlaneseq
    %v975 = vshrl.u32 %v974, 7
    %v976 = vsub.s32 %v973, %v975
    %v977 = vrot.slane %v961, %v976
    %v979 = vunpack.c.l.s4 1966171168
    %v980 = vunpack.c.0.s8 %v979
    %v981 = vlaneseq
    %v982 = vshrl.u32 %v981, 7
    %v983 = vsub.s32 %v980, %v982
    %v984 = vrot.slane %v968, %v983
    %v986 = vunpack.c.l.s4 1966171168
    %v987 = vunpack.c.0.s8 %v986
    %v988 = vlaneseq
    %v989 = vshrl.u32 %v988, 7
    %v990 = vsub.s32 %v987, %v989
    %v991 = vrot.slane %v969, %v990
    %v993 = vunpack.c.l.s4 1966171168
    %v994 = vunpack.c.0.s8 %v993
    %v995 = vlaneseq
    %v996 = vshrl.u32 %v995, 7
    %v997 = vsub.s32 %v994, %v996
    %v998 = vrot.slane %v970, %v997
    %v999 = vcombine.high %v977, %v977
    %v1000 = vcombine.high %v984, %v984
    %v1001 = vcombine.high %v991, %v991
    %v1002 = vcombine.high %v998, %v998
    %1011 = vst [vmem:[#allocation8] sm:$0x1] %v977
    %1012 = vst [vmem:[#allocation8 + $0x1] sm:$0x1] %v991
    %1013 = vst [vmem:[#allocation8 + $0x2] sm:$0x1] %v999
    %1014 = vst [vmem:[#allocation8 + $0x3] sm:$0x1] %v1001
    %1015 = vst [vmem:[#allocation8 + $0x4] sm:$0x1] %v984
    %1016 = vst [vmem:[#allocation8 + $0x5] sm:$0x1] %v998
    %1017 = vst [vmem:[#allocation8 + $0x6] sm:$0x1] %v1000
    %1018 = vst [vmem:[#allocation8 + $0x7] sm:$0x1] %v1002
    // Predicated region
    $region34: #{tpu_custom_call.1} parent=1 // pred_check
      _
    $region35: #{tpu_custom_call.1} parent=1 // pred_check_branch
      %1020 = sbr.rel (0) target = $region37
    $region36: #{tpu_custom_call.1} parent=1 // pred_region
      %s1022 = ssub.s32 128, 16
      %1023 = vsyncadd [#allocation4], %s1022
      %s1024 = sshll.u32 [#allocation8], 4
      %s1025 = int_to_ptr.vmem [resolvable:$true] %s1024
      %1030 = dma.vmem_to_hbm [thread:$0]  %s1025, 16, %s5, [#allocation4], 16, 16, 1
    $region37: #{tpu_custom_call.1} parent=1 // pred_fallthru
      _
    // Predicated region
    $region38: #{tpu_custom_call.1} parent=1 // pred_check
      _
    $region39: #{tpu_custom_call.1} parent=1 // pred_check_branch
      %1032 = sbr.rel (0) target = $region41
    $region40: #{tpu_custom_call.1} parent=1 // pred_region
      %1033 = dma.done [#allocation4], 128
    $region41: #{tpu_custom_call.1} parent=1 // pred_fallthru
      _
    %1034 = vsyncpa [#allocation3], 1
    %1035 = vsyncpa [#allocation6], 1
    %1036 = vsyncpa [#allocation4], 1

</llo_original>
